<compile_context>
chip_gen: v7x
topology: tpu7x:2x2x1
jax: 0.10.0
libtpu: 0.0.40
codegen_flags: <defaults>
</compile_context>

<pallas_src>
import functools

import jax
import jax.numpy as jnp
from jax import lax
from jax.experimental import pallas as pl
from jax.experimental.pallas import tpu as pltpu

D_MODEL = 224


def pooler_kernel(x_ref, w_ref, b_ref, o_ref):
    # x_ref: [TM, D] tile of the batch, w_ref: [D_out, D_in] (PyTorch layout),
    # b_ref: [1, D_out].  Contract x dim 1 with w dim 1 (== x @ W.T) on the
    # MXU with f32 accumulation, add bias, tanh on the EUP.
    x = x_ref[...]
    w = w_ref[...]
    b = b_ref[...]
    y = lax.dot_general(
        x, w,
        dimension_numbers=(((1,), (1,)), ((), ())),
        preferred_element_type=jnp.float32,
    ) + b
    o_ref[...] = jnp.tanh(y).astype(o_ref.dtype)


@functools.partial(jax.jit, static_argnames=("tm",))
def pooler_forward(x, weight, bias, *, tm=512):
    """x: [B, d_model]; weight: [d_model_out, d_model_in] (PyTorch layout); bias: [d_model]."""
    B, D = x.shape
    assert weight.shape == (D, D) and bias.shape == (D,)

    # Batch tile: cap at `tm` rows (keeps double-buffered VMEM small and lets
    # the pipeline overlap DMA with compute); small batches use a single tile.
    TM = min(B, tm)
    grid = (pl.cdiv(B, TM),)

    b2 = bias.reshape(1, D)  # 2-D for TPU-friendly layout
    itemsize = jnp.dtype(x.dtype).itemsize
    cost = pl.CostEstimate(
        flops=2 * B * D * D,
        transcendentals=B * D,
        bytes_accessed=(2 * B * D + D * D + D) * itemsize,
    )

    return pl.pallas_call(
        pooler_kernel,
        out_shape=jax.ShapeDtypeStruct((B, D), x.dtype),
        grid_spec=pltpu.PrefetchScalarGridSpec(
            num_scalar_prefetch=0,
            grid=grid,
            in_specs=[
                pl.BlockSpec((TM, D), lambda i: (i, 0)),   # x tile, pipelined over batch
                pl.BlockSpec((D, D), lambda i: (0, 0)),    # weight resident (constant index)
                pl.BlockSpec((1, D), lambda i: (0, 0)),    # bias resident
            ],
            out_specs=pl.BlockSpec((TM, D), lambda i: (i, 0)),
        ),
        compiler_params=pltpu.CompilerParams(
            dimension_semantics=("parallel",),            # shard batch tiles across TCs (v7x)
            vmem_limit_bytes=32 * 1024 * 1024,
        ),
        cost_estimate=cost,
    )(x, weight, b2)


if __name__ == "__main__":
    key = jax.random.PRNGKey(0)
    kx, kw, kb, kx2 = jax.random.split(key, 4)

    # Deterministic synthetic parameters, same shapes as nn.Linear(224, 224).
    bound = 1.0 / (D_MODEL ** 0.5)
    weight = jax.random.uniform(kw, (D_MODEL, D_MODEL), jnp.float32, -bound, bound)
    bias = jax.random.uniform(kb, (D_MODEL,), jnp.float32, -bound, bound)

    # Small production-like shape: batch=2.
    batch = 2
    x = jax.random.normal(kx, (batch, D_MODEL), jnp.float32)
    out = jax.block_until_ready(pooler_forward(x, weight, bias))
    ref = jnp.tanh(x @ weight.T + bias)
    assert out.shape == (batch, D_MODEL)
    assert jnp.allclose(out, ref, atol=1e-5, rtol=1e-5)

    # Exercise the tiled / pipelined path (grid > 1, partial final tile).
    batch2 = 40
    x2 = jax.random.normal(kx2, (batch2, D_MODEL), jnp.float32)
    out2 = jax.block_until_ready(pooler_forward(x2, weight, bias, tm=16))
    ref2 = jnp.tanh(x2 @ weight.T + bias)
    assert out2.shape == (batch2, D_MODEL)
    assert jnp.allclose(out2, ref2, atol=1e-5, rtol=1e-5)

    print("KERNEL_OK")
</pallas_src>

<mosaic_0001>
module attributes {stable_mosaic.version = 11 : i64} {
  func.func @pooler_kernel(%arg0: i32, %arg1: memref<2x224xf32, #tpu.memory_space<vmem>>, %arg2: memref<224x224xf32, #tpu.memory_space<vmem>>, %arg3: memref<1x224xf32, #tpu.memory_space<vmem>>, %arg4: memref<2x224xf32, #tpu.memory_space<vmem>>) attributes {dimension_semantics = [#tpu.dimension_semantics<parallel>], iteration_bounds = array<i64: 1>, scalar_prefetch = 0 : i64, scratch_operands = 0 : i64, tpu.core_type = #tpu.core_type<tc>, window_params = [{transform_indices = @transform_0, window_bounds = array<i64: 2, 224>}, {pipeline_mode = #tpu.pipeline_mode<synchronous>, transform_indices = @transform_1, window_bounds = array<i64: 224, 224>}, {pipeline_mode = #tpu.pipeline_mode<synchronous>, transform_indices = @transform_2, window_bounds = array<i64: 1, 224>}, {transform_indices = @transform_3, window_bounds = array<i64: 2, 224>}]} {
    %c0 = arith.constant 0 : index
    %c0_0 = arith.constant 0 : index
    %0 = vector.load %arg1[%c0, %c0_0] : memref<2x224xf32, #tpu.memory_space<vmem>>, vector<2x224xf32>
    %c0_1 = arith.constant 0 : index
    %c0_2 = arith.constant 0 : index
    %1 = vector.load %arg2[%c0_1, %c0_2] : memref<224x224xf32, #tpu.memory_space<vmem>>, vector<224x224xf32>
    %c0_3 = arith.constant 0 : index
    %c0_4 = arith.constant 0 : index
    %2 = vector.load %arg3[%c0_3, %c0_4] : memref<1x224xf32, #tpu.memory_space<vmem>>, vector<1x224xf32>
    %cst = arith.constant dense<0.000000e+00> : vector<2x224xf32>
    %3 = tpu.matmul %0, %1, %cst {dimension_numbers = #tpu.dot_dimension_numbers<[1], [1], [0], [0], [0, 0, 1, 0], [], []>} : vector<2x224xf32>, vector<224x224xf32>, vector<2x224xf32> -> vector<2x224xf32>
    %4 = vector.broadcast %2 : vector<1x224xf32> to vector<2x224xf32>
    %5 = arith.addf %3, %4 : vector<2x224xf32>
    %6 = math.tanh %5 : vector<2x224xf32>
    %c0_5 = arith.constant 0 : index
    %c0_6 = arith.constant 0 : index
    %7 = vector.load %arg4[%c0_5, %c0_6] : memref<2x224xf32, #tpu.memory_space<vmem>>, vector<2x224xf32>
    tpu.vector_store %arg4[%c0_5, %c0_6], %6 {strides = array<i32>} : memref<2x224xf32, #tpu.memory_space<vmem>>, vector<2x224xf32>,
    return
  }
  func.func @transform_0(%arg0: i32) -> (i32, i32) {
    %c0_i32 = arith.constant 0 : i32
    %c0_i32_0 = arith.constant 0 : i32
    return %arg0, %c0_i32 : i32, i32
  }
  func.func @transform_1(%arg0: i32) -> (i32, i32) {
    %c0_i32 = arith.constant 0 : i32
    %c0_i32_0 = arith.constant 0 : i32
    %c0_i32_1 = arith.constant 0 : i32
    return %c0_i32, %c0_i32_0 : i32, i32
  }
  func.func @transform_2(%arg0: i32) -> (i32, i32) {
    %c0_i32 = arith.constant 0 : i32
    %c0_i32_0 = arith.constant 0 : i32
    %c0_i32_1 = arith.constant 0 : i32
    return %c0_i32, %c0_i32_0 : i32, i32
  }
  func.func @transform_3(%arg0: i32) -> (i32, i32) {
    %c0_i32 = arith.constant 0 : i32
    %c0_i32_0 = arith.constant 0 : i32
    return %arg0, %c0_i32 : i32, i32
  }
}

</mosaic_0001>

<llo_original>
// kernel: pooler_forward.1
$region0: #{pooler_forward.1}
  #allocation0 [shape = 'u32[]', space=smem, size = 0x4, offset = 0x4, fixed_abs, tag = 'smem constant byte address 0x4 - core index']
  #allocation1 [shape = 'u32[144,128]{1,0:T(1,128)}', space=vmem, size = 0x12000, scoped, tag = 'internal scratch']
  %s0 = inlined_call_operand.hbm [shape: f32[2,224], index: 0, kind: input, shape index: {}]
  %s1 = inlined_call_operand.hbm [shape: f32[224,224], index: 1, kind: input, shape index: {}]
  %s2 = inlined_call_operand.vmem [shape: f32[1,224], index: 2, kind: input, shape index: {}]
  %s3 = inlined_call_operand.hbm [shape: f32[2,224], index: 3, kind: output, shape index: {}]
  %s4 = sld [smem:[#allocation0]]
  $region30: #{pooler_forward.1} parent=0
    _
  %s6 = ssub.s32 1, %s4
  %s7 = scalar_select 0, %s6, %s4
  $region1: #{pooler_forward.1} parent=0
    #allocation2 [shape = 'u8[2048]{0}', space=vmem, size = 0x800, scoped, tag = 'input window, operand 0, single buffered']
    #allocation3 [shape = 's32[1]{0}', space=sflag, size = 0x4, scoped, tag = 'scoped memory for pooler_forward.1']
    #allocation4 [shape = 's32[1]{0}', space=sflag, size = 0x4, scoped, tag = 'scoped memory for pooler_forward.1']
    #allocation5 [shape = 'u8[229376]{0}', space=vmem, size = 0x38000, scoped, tag = 'input window, operand 1, single buffered']
    #allocation6 [shape = 's32[1]{0}', space=sflag, size = 0x4, scoped, tag = 'scoped memory for pooler_forward.1']
    #allocation7 [shape = 'u8[2048]{0}', space=vmem, size = 0x800, scoped, tag = 'output window, operand 0, single buffered']
    %8 = vsyncpa [#allocation3], 0
    %9 = vsyncpa [#allocation6], 0
    %10 = vsyncpa [#allocation4], 0
    // Predicated region
    $region2: #{pooler_forward.1} parent=1 // pred_check
      _
    $region3: #{pooler_forward.1} parent=1 // pred_check_branch
      %12 = sbr.rel (0) target = $region5
    $region4: #{pooler_forward.1} parent=1 // pred_region
      %s14 = ssub.s32 64, 64
      %15 = vsyncadd [#allocation3], %s14
      %s17 = sshll.u32 [#allocation2], 4
      %s18 = int_to_ptr.vmem [resolvable:$true] %s17
      %20 = dma.hbm_to_vmem [thread:$0]  %s0, 64, %s18, [#allocation3]
    $region5: #{pooler_forward.1} parent=1 // pred_fallthru
      _
    // Predicated region
    $region6: #{pooler_forward.1} parent=1 // pred_check
      _
    $region7: #{pooler_forward.1} parent=1 // pred_check_branch
      %22 = sbr.rel (0) target = $region9
    $region8: #{pooler_forward.1} parent=1 // pred_region
      %s24 = ssub.s32 7168, 7168
      %25 = vsyncadd [#allocation6], %s24
      %s26 = sshll.u32 [#allocation5], 4
      %s27 = int_to_ptr.vmem [resolvable:$true] %s26
      %32 = dma.hbm_to_vmem [thread:$0]  %s1, 7168, %s27, [#allocation6], 256, 256, 16
    $region9: #{pooler_forward.1} parent=1 // pred_fallthru
      _
    // Predicated region
    $region10: #{pooler_forward.1} parent=1 // pred_check
      _
    $region11: #{pooler_forward.1} parent=1 // pred_check_branch
      %34 = sbr.rel (0) target = $region13
    $region12: #{pooler_forward.1} parent=1 // pred_region
      _
    $region13: #{pooler_forward.1} parent=1 // pred_fallthru
      _
    // Predicated region
    $region14: #{pooler_forward.1} parent=1 // pred_check
      _
    $region15: #{pooler_forward.1} parent=1 // pred_check_branch
      %36 = sbr.rel (0) target = $region17
    $region16: #{pooler_forward.1} parent=1 // pred_region
      %37 = dma.done [#allocation3], 64
    $region17: #{pooler_forward.1} parent=1 // pred_fallthru
      _
    // Predicated region
    $region18: #{pooler_forward.1} parent=1 // pred_check
      _
    $region19: #{pooler_forward.1} parent=1 // pred_check_branch
      %39 = sbr.rel (0) target = $region21
    $region20: #{pooler_forward.1} parent=1 // pred_region
      %40 = dma.done [#allocation6], 7168
    $region21: #{pooler_forward.1} parent=1 // pred_fallthru
      _
    %v41 = vld [vmem:[#allocation2] sm:$0xf]
    %v42 = vld [vmem:[#allocation5] sm:$0xff]
    %v43 = vld [vmem:[#allocation5 + $0x8] sm:$0xff]
    %v44 = vld [vmem:[#allocation5 + $0x10] sm:$0xff]
    %v45 = vld [vmem:[#allocation5 + $0x18] sm:$0xff]
    %v46 = vld [vmem:[#allocation5 + $0x20] sm:$0xff]
    %v47 = vld [vmem:[#allocation5 + $0x28] sm:$0xff]
    %v48 = vld [vmem:[#allocation5 + $0x30] sm:$0xff]
    %v49 = vld [vmem:[#allocation5 + $0x38] sm:$0xff]
    %v50 = vld [vmem:[#allocation5 + $0x40] sm:$0xff]
    %v51 = vld [vmem:[#allocation5 + $0x48] sm:$0xff]
    %v52 = vld [vmem:[#allocation5 + $0x50] sm:$0xff]
    %v53 = vld [vmem:[#allocation5 + $0x58] sm:$0xff]
    %v54 = vld [vmem:[#allocation5 + $0x60] sm:$0xff]
    %v55 = vld [vmem:[#allocation5 + $0x68] sm:$0xff]
    %v56 = vld [vmem:[#allocation5 + $0x70] sm:$0xff]
    %v57 = vld [vmem:[#allocation5 + $0x78] sm:$0xff]
    %v58 = vld [vmem:[#allocation5 + $0x80] sm:$0xff]
    %v59 = vld [vmem:[#allocation5 + $0x88] sm:$0xff]
    %v60 = vld [vmem:[#allocation5 + $0x90] sm:$0xff]
    %v61 = vld [vmem:[#allocation5 + $0x98] sm:$0xff]
    %v62 = vld [vmem:[#allocation5 + $0xa0] sm:$0xff]
    %v63 = vld [vmem:[#allocation5 + $0xa8] sm:$0xff]
    %v64 = vld [vmem:[#allocation5 + $0xb0] sm:$0xff]
    %v65 = vld [vmem:[#allocation5 + $0xb8] sm:$0xff]
    %v66 = vld [vmem:[#allocation5 + $0xc0] sm:$0xff]
    %v67 = vld [vmem:[#allocation5 + $0xc8] sm:$0xff]
    %v68 = vld [vmem:[#allocation5 + $0xd0] sm:$0xff]
    %v69 = vld [vmem:[#allocation5 + $0xd8] sm:$0xff]
    %v70 = vld [vmem:[#allocation5 + $0xe0] sm:$0xff]
    %v71 = vld [vmem:[#allocation5 + $0xe8] sm:$0xff]
    %v72 = vld [vmem:[#allocation5 + $0xf0] sm:$0xff]
    %v73 = vld [vmem:[#allocation5 + $0xf8] sm:$0xff]
    %v74 = vld [vmem:[#allocation5 + $0x100] sm:$0xff]
    %v75 = vld [vmem:[#allocation5 + $0x108] sm:$0xff]
    %v76 = vld [vmem:[#allocation5 + $0x110] sm:$0xff]
    %v77 = vld [vmem:[#allocation5 + $0x118] sm:$0xff]
    %v78 = vld [vmem:[#allocation5 + $0x120] sm:$0xff]
    %v79 = vld [vmem:[#allocation5 + $0x128] sm:$0xff]
    %v80 = vld [vmem:[#allocation5 + $0x130] sm:$0xff]
    %v81 = vld [vmem:[#allocation5 + $0x138] sm:$0xff]
    %v82 = vld [vmem:[#allocation5 + $0x140] sm:$0xff]
    %v83 = vld [vmem:[#allocation5 + $0x148] sm:$0xff]
    %v84 = vld [vmem:[#allocation5 + $0x150] sm:$0xff]
    %v85 = vld [vmem:[#allocation5 + $0x158] sm:$0xff]
    %v86 = vld [vmem:[#allocation5 + $0x160] sm:$0xff]
    %v87 = vld [vmem:[#allocation5 + $0x168] sm:$0xff]
    %v88 = vld [vmem:[#allocation5 + $0x170] sm:$0xff]
    %v89 = vld [vmem:[#allocation5 + $0x178] sm:$0xff]
    %v90 = vld [vmem:[#allocation5 + $0x180] sm:$0xff]
    %v91 = vld [vmem:[#allocation5 + $0x188] sm:$0xff]
    %v92 = vld [vmem:[#allocation5 + $0x190] sm:$0xff]
    %v93 = vld [vmem:[#allocation5 + $0x198] sm:$0xff]
    %v94 = vld [vmem:[#allocation5 + $0x1a0] sm:$0xff]
    %v95 = vld [vmem:[#allocation5 + $0x1a8] sm:$0xff]
    %v96 = vld [vmem:[#allocation5 + $0x1b0] sm:$0xff]
    %v97 = vld [vmem:[#allocation5 + $0x1b8] sm:$0xff]
    %v98 = vld [vmem:[%s2] sm:$0x3]
    %v100 = vlaneseq
    %v101 = vshrl.u32 %v100, 7
    %v102 = vsub.s32 0, %v101
    %v103 = vrot.slane %v98, %v102
    %v104 = vlaneseq
    %v105 = vshrl.u32 %v104, 7
    %v106 = vsub.s32 1, %v105
    %v107 = vrot.slane %v98, %v106
    %v112 = vunpack.c.l.s4 1983009808
    %v113 = vunpack.c.0.s8 %v112
    %v114 = vlaneseq
    %v115 = vshrl.u32 %v114, 7
    %v116 = vsub.s32 %v113, %v115
    %v117 = vrot.slane %v41, %v116
    %v118 = vcombine.high %v117, %v117
    %vm120 = vcmask 785408
    %v121 = vsel %vm120, %v118, 0
    %v124 = vsel %vm120, %v43, 0
    %v127 = vsel %vm120, %v45, 0
    %v130 = vsel %vm120, %v47, 0
    %v133 = vsel %vm120, %v49, 0
    %v136 = vsel %vm120, %v51, 0
    %v139 = vsel %vm120, %v53, 0
    %v142 = vsel %vm120, %v55, 0
    %v145 = vsel %vm120, %v57, 0
    %v148 = vsel %vm120, %v59, 0
    %v151 = vsel %vm120, %v61, 0
    %v154 = vsel %vm120, %v63, 0
    %v157 = vsel %vm120, %v65, 0
    %v160 = vsel %vm120, %v67, 0
    %v163 = vsel %vm120, %v69, 0
    %v166 = vsel %vm120, %v71, 0
    %v169 = vsel %vm120, %v73, 0
    %v172 = vsel %vm120, %v75, 0
    %v175 = vsel %vm120, %v77, 0
    %v178 = vsel %vm120, %v79, 0
    %v181 = vsel %vm120, %v81, 0
    %v184 = vsel %vm120, %v83, 0
    %v187 = vsel %vm120, %v85, 0
    %v190 = vsel %vm120, %v87, 0
    %v193 = vsel %vm120, %v89, 0
    %v196 = vsel %vm120, %v91, 0
    %v199 = vsel %vm120, %v93, 0
    %v202 = vsel %vm120, %v95, 0
    %v205 = vsel %vm120, %v97, 0
    %207 = vmatprep.subr.mxu0 %v124
    %208 = vmatpush1.xpose.msra.mxu0 %v42
    %209 = vmatprep.subr.mxu0 %v127
    %210 = vmatpush1.xpose.msra.mxu0 %v44
    %211 = vmatprep.subr.mxu0 %v130
    %212 = vmatpush1.xpose.msra.mxu0 %v46
    %213 = vmatprep.subr.mxu0 %v133
    %214 = vmatpush1.xpose.msra.mxu0 %v48
    %215 = vmatprep.subr.mxu0 %v136
    %216 = vmatpush1.xpose.msra.mxu0 %v50
    %217 = vmatprep.subr.mxu0 %v139
    %218 = vmatpush1.xpose.msra.mxu0 %v52
    %219 = vmatprep.subr.mxu0 %v142
    %220 = vmatpush1.xpose.msra.mxu0 %v54
    %221 = vmatprep.subr.mxu0 %v145
    %222 = vmatpush1.xpose.msra.mxu0 %v56
    %223 = vmatprep.subr.mxu0 %v148
    %224 = vmatpush1.xpose.msra.mxu0 %v58
    %225 = vmatprep.subr.mxu0 %v151
    %226 = vmatpush1.xpose.msra.mxu0 %v60
    %227 = vmatprep.subr.mxu0 %v154
    %228 = vmatpush1.xpose.msra.mxu0 %v62
    %229 = vmatprep.subr.mxu0 %v157
    %230 = vmatpush1.xpose.msra.mxu0 %v64
    %231 = vmatprep.subr.mxu0 %v160
    %232 = vmatpush1.xpose.msra.mxu0 %v66
    %233 = vmatprep.subr.mxu0 %v163
    %234 = vmatpush1.xpose.msra.mxu0 %v68
    %235 = vmatprep.subr.mxu0 %v166
    %236 = vmatpush1.xpose.msra.mxu0 %v70
    %237 = vmatprep.subr.mxu0 %v169
    %238 = vmatpush1.xpose.msra.mxu0 %v72
    %239 = vmatprep.subr.mxu0 %v172
    %240 = vmatpush1.xpose.msra.mxu0 %v74
    %241 = vmatprep.subr.mxu0 %v175
    %242 = vmatpush1.xpose.msra.mxu0 %v76
    %243 = vmatprep.subr.mxu0 %v178
    %244 = vmatpush1.xpose.msra.mxu0 %v78
    %245 = vmatprep.subr.mxu0 %v181
    %246 = vmatpush1.xpose.msra.mxu0 %v80
    %247 = vmatprep.subr.mxu0 %v184
    %248 = vmatpush1.xpose.msra.mxu0 %v82
    %249 = vmatprep.subr.mxu0 %v187
    %250 = vmatpush1.xpose.msra.mxu0 %v84
    %251 = vmatprep.subr.mxu0 %v190
    %252 = vmatpush1.xpose.msra.mxu0 %v86
    %253 = vmatprep.subr.mxu0 %v193
    %254 = vmatpush1.xpose.msra.mxu0 %v88
    %255 = vmatprep.subr.mxu0 %v196
    %256 = vmatpush1.xpose.msra.mxu0 %v90
    %257 = vmatprep.subr.mxu0 %v199
    %258 = vmatpush1.xpose.msra.mxu0 %v92
    %259 = vmatprep.subr.mxu0 %v202
    %260 = vmatpush1.xpose.msra.mxu0 %v94
    %261 = vmatprep.subr.mxu0 %v205
    %262 = vmatpush1.xpose.msra.mxu0 %v96
    %263 = vmatprep.subr.mxu0 0.0
    %264 = vmatpush1.xpose.msra.mxu0 0.0
    %265 = vmatprep.subr.mxu0 0.0
    %266 = vmatpush1.xpose.msra.mxu0 0.0
    %267 = vmatprep.subr.mxu0 0.0
    %268 = vmatpush1.xpose.msra.mxu0 0.0
    %269 = vmatprep.subr.mxu0 0.0
    %270 = vmatpush1.xpose.msra.mxu0 0.0
    %271 = vmatprep.mubr.f32.mxu0 %v121
    %272 = vmatmul.mubr.f32.gmra.mrb[0].mxu0 %v117
    %v273 = vpop.f32.mrb[0].mxu0
    %v274 = vadd.f32 %v103, %v273
    %v275 = vpop.f32.mrb[0].mxu0
    %v276 = vadd.f32 %v107, %v275
    %277 = vdwg.mxu0
    %v278 = vtanh.pop %v274
    %v279 = vtanh.pop %v276
    %v282 = vcombine.low %v278, %v279
    %v284 = vunpack.c.l.s4 1983009808
    %v285 = vunpack.c.0.s8 %v284
    %v286 = vlaneseq
    %v287 = vshrl.u32 %v286, 7
    %v288 = vsub.s32 %v285, %v287
    %v289 = vrot.slane %v282, %v288
    %vm291 = vcmask 1041408
    %vm292 = vcmask 781314
    %vm293 = vmor %vm292, %vm291
    %294 = vst.msk [vmem:[#allocation7] sm:$0xf] %vm293, %v289
    // Predicated region
    $region22: #{pooler_forward.1} parent=1 // pred_check
      _
    $region23: #{pooler_forward.1} parent=1 // pred_check_branch
      %296 = sbr.rel (0) target = $region25
    $region24: #{pooler_forward.1} parent=1 // pred_region
      %s298 = ssub.s32 64, 64
      %299 = vsyncadd [#allocation4], %s298
      %s301 = sshll.u32 [#allocation7], 4
      %s302 = int_to_ptr.vmem [resolvable:$true] %s301
      %304 = dma.vmem_to_hbm [thread:$0]  %s302, 64, %s3, [#allocation4]
    $region25: #{pooler_forward.1} parent=1 // pred_fallthru
      _
    // Predicated region
    $region26: #{pooler_forward.1} parent=1 // pred_check
      _
    $region27: #{pooler_forward.1} parent=1 // pred_check_branch
      %306 = sbr.rel (0) target = $region29
    $region28: #{pooler_forward.1} parent=1 // pred_region
      %307 = dma.done [#allocation4], 64
    $region29: #{pooler_forward.1} parent=1 // pred_fallthru
      _
    %308 = vsyncpa [#allocation3], 1
    %309 = vsyncpa [#allocation6], 1
    %310 = vsyncpa [#allocation4], 1

</llo_original>
